<compile_context>
chip_gen: v6e
topology: v6e:2x2x1
jax: 0.10.0
libtpu: 0.0.40
codegen_flags: <defaults>
</compile_context>

<pallas_src>
import functools
import math

import jax
import jax.numpy as jnp
from jax.experimental import pallas as pl
from jax.experimental.pallas import tpu as pltpu

LANE = 128


def _round_up(x, m):
    return (x + m - 1) // m * m


def _gcn_fused_kernel(feat_ref, adj_ref, norm_ref, w_ref, b_ref, out_ref, *,
                      n_layers):
    """Whole GCN stack in one kernel invocation.

    feat_ref : (Np, Fp) bf16   node features
    adj_ref  : (Np, Np) bf16   binary adjacency {0,1} (exact in bf16)
    norm_ref : (Np, 1)  f32    1/sqrt(degree), zero in padded rows
    w_ref    : (L, Fp, Fp) bf16  zero-padded layer weights
    b_ref    : (L, 1, Fp)  f32   zero-padded layer biases
    out_ref  : (Np, Fp) f32    final logits
    """
    adj = adj_ref[...]                                   # resident bf16 adjacency
    norm = norm_ref[...]                                 # (Np, 1) f32
    h = feat_ref[...]                                    # bf16 activation carry

    out = None
    for l in range(n_layers):                            # static unrolled layer loop
        # feature transform on MXU: bf16 operands, f32 accumulation
        hw = jnp.dot(h, w_ref[l], preferred_element_type=jnp.float32)
        hw = hw * norm                                   # f32 pre-norm (D^-1/2)
        # neighborhood aggregation (copy_src + sum) == A @ (hw * norm)
        agg = jnp.dot(adj, hw.astype(jnp.bfloat16),
                      preferred_element_type=jnp.float32)
        out = agg * norm + b_ref[l]                      # f32 post-norm + bias
        if l < n_layers - 1:
            # ReLU in f32, single cast into the bf16 carry.
            h = jnp.maximum(out, 0.0).astype(jnp.bfloat16)

    out_ref[...] = out                                   # last layer: no activation


def gcn_forward(features, params, adj, norm):
    """Full GCN stack in a single fused pallas_call.

    features: (N, F_in) f32, adj: (N, N) f32 {0,1}, norm: (N, 1) f32.
    params: list of (W: (fi, fo), b: (1, fo)) per layer.
    """
    n, f_in = features.shape
    n_layers = len(params)
    n_classes = params[-1][0].shape[1]

    # pad node and feature dims to lane-dense multiples of 128
    dims = [f_in] + [w.shape[1] for w, _ in params]
    f_pad = max(_round_up(d, LANE) for d in dims)
    n_pad = _round_up(n, LANE)

    feat_p = jnp.pad(features, ((0, n_pad - n), (0, f_pad - f_in))
                     ).astype(jnp.bfloat16)
    adj_p = jnp.pad(adj, ((0, n_pad - n), (0, n_pad - n))).astype(jnp.bfloat16)
    norm_p = jnp.pad(norm, ((0, n_pad - n), (0, 0))).astype(jnp.float32)

    # zero-pad weights/biases to a common (Fp, Fp) / (1, Fp) shape and stack
    w_stack = jnp.stack([
        jnp.pad(w, ((0, f_pad - w.shape[0]), (0, f_pad - w.shape[1])))
        for w, _ in params
    ]).astype(jnp.bfloat16)                               # (L, Fp, Fp)
    b_stack = jnp.stack([
        jnp.pad(b, ((0, 0), (0, f_pad - b.shape[1])))
        for _, b in params
    ]).astype(jnp.float32)                                # (L, 1, Fp)

    # Explicit VMEM budget: resident operands (x2 safety for any buffering) +
    # a few (Np, Fp) f32 working slabs, with headroom.
    resident_bytes = (feat_p.size * 2 + adj_p.size * 2 + norm_p.size * 4
                      + w_stack.size * 2 + b_stack.size * 4
                      + n_pad * f_pad * 4)
    working_bytes = 6 * n_pad * f_pad * 4
    vmem_limit_bytes = min(
        max(2 * resident_bytes + working_bytes + (4 << 20), 32 << 20),
        100 << 20)

    kernel = functools.partial(_gcn_fused_kernel, n_layers=n_layers)

    out = pl.pallas_call(
        kernel,
        out_shape=jax.ShapeDtypeStruct((n_pad, f_pad), jnp.float32),
        grid_spec=pltpu.PrefetchScalarGridSpec(
            num_scalar_prefetch=0,
            grid=(1,),                                    # single step: no pipeline
            in_specs=[
                pl.BlockSpec((n_pad, f_pad), lambda i: (0, 0)),           # features
                pl.BlockSpec((n_pad, n_pad), lambda i: (0, 0)),           # adjacency
                pl.BlockSpec((n_pad, 1), lambda i: (0, 0)),               # norm
                pl.BlockSpec((n_layers, f_pad, f_pad), lambda i: (0, 0, 0)),  # W stack
                pl.BlockSpec((n_layers, 1, f_pad), lambda i: (0, 0, 0)),      # b stack
            ],
            out_specs=pl.BlockSpec((n_pad, f_pad), lambda i: (0, 0)),
        ),
        compiler_params=pltpu.CompilerParams(
            dimension_semantics=("arbitrary",),
            vmem_limit_bytes=int(vmem_limit_bytes),
        ),
    )(feat_p, adj_p, norm_p, w_stack, b_stack)

    # NOTE: padded rows (n..n_pad) of `out` contain only the broadcast bias of
    # the last layer (harmless: padded adjacency columns are zero); slice off.
    return out[:n, :n_classes]


def init_gcn_params(key, in_feats, n_hidden, n_classes, n_layers):
    """Matches GCNLayer.reset_parameters (uniform +/- 1/sqrt(out_feats))."""
    dims = [(in_feats, n_hidden)]
    for _ in range(n_layers - 1):
        dims.append((n_hidden, n_hidden))
    dims.append((n_hidden, n_classes))

    params = []
    for (fi, fo) in dims:
        key, kw, kb = jax.random.split(key, 3)
        stdv = 1.0 / math.sqrt(fo)
        w = jax.random.uniform(kw, (fi, fo), jnp.float32, -stdv, stdv)
        b = jax.random.uniform(kb, (1, fo), jnp.float32, -stdv, stdv)
        params.append((w, b))
    return params


def build_graph(key, n_nodes, edge_prob=0.15):
    """Dense symmetric adjacency with self loops; norm = 1/sqrt(degree)."""
    a = (jax.random.uniform(key, (n_nodes, n_nodes)) < edge_prob).astype(jnp.float32)
    a = jnp.maximum(a, a.T)                                   # symmetrize
    a = jnp.maximum(a, jnp.eye(n_nodes, dtype=jnp.float32))   # self loops
    deg = a.sum(axis=1, keepdims=True)                        # (N, 1)
    norm = 1.0 / jnp.sqrt(deg)
    return a, norm


if __name__ == "__main__":
    N_NODES = 64
    IN_FEATS = 16
    N_HIDDEN = 32
    N_CLASSES = 8
    N_LAYERS = 2   # -> 3 GCNLayers: in->hid (relu), hid->hid (relu), hid->cls (none)

    root = jax.random.PRNGKey(0)
    k_feat, k_graph, k_param = jax.random.split(root, 3)

    features = jax.random.normal(k_feat, (N_NODES, IN_FEATS), jnp.float32)
    adj, norm = build_graph(k_graph, N_NODES)
    params = init_gcn_params(k_param, IN_FEATS, N_HIDDEN, N_CLASSES, N_LAYERS)

    # TODO(synk): dropout is a no-op here (inference semantics); training-mode
    # dropout masks would use pltpu.prng_seed / prng_random_bits in-kernel.
    out = gcn_forward(features, params, adj, norm)
    out = jax.block_until_ready(out)

    # pure-JAX f32 reference (original per-layer formulation with explicit norm)
    hp = jax.lax.Precision.HIGHEST
    h_ref = features
    for i, (w, b) in enumerate(params):
        hw = jnp.dot(h_ref, w, precision=hp) * norm
        h_ref = jnp.dot(adj, hw, precision=hp) * norm + b
        if i < len(params) - 1:
            h_ref = jnp.maximum(h_ref, 0.0)

    assert out.shape == (N_NODES, N_CLASSES)
    max_err = float(jnp.max(jnp.abs(out - h_ref)))
    # only remaining quantization: bf16 MXU operands (adjacency {0,1} is exact,
    # norm applied in f32) -> tighter tolerance than the folded-norm version
    assert jnp.allclose(out, h_ref, atol=2e-2, rtol=2e-2), max_err

    print("KERNEL_OK")
</pallas_src>

<mosaic_0001>
module attributes {stable_mosaic.version = 11 : i64} {
  func.func @_gcn_fused_kernel(%arg0: i32, %arg1: memref<128x128xbf16, #tpu.memory_space<vmem>>, %arg2: memref<128x128xbf16, #tpu.memory_space<vmem>>, %arg3: memref<128x1xf32, #tpu.memory_space<vmem>>, %arg4: memref<3x128x128xbf16, #tpu.memory_space<vmem>>, %arg5: memref<3x1x128xf32, #tpu.memory_space<vmem>>, %arg6: memref<128x128xf32, #tpu.memory_space<vmem>>) attributes {dimension_semantics = [#tpu.dimension_semantics<arbitrary>], iteration_bounds = array<i64: 1>, scalar_prefetch = 0 : i64, scratch_operands = 0 : i64, tpu.core_type = #tpu.core_type<tc>, window_params = [{pipeline_mode = #tpu.pipeline_mode<synchronous>, transform_indices = @transform_0, window_bounds = array<i64: 128, 128>}, {pipeline_mode = #tpu.pipeline_mode<synchronous>, transform_indices = @transform_1, window_bounds = array<i64: 128, 128>}, {pipeline_mode = #tpu.pipeline_mode<synchronous>, transform_indices = @transform_2, window_bounds = array<i64: 128, 1>}, {pipeline_mode = #tpu.pipeline_mode<synchronous>, transform_indices = @transform_3, window_bounds = array<i64: 3, 128, 128>}, {pipeline_mode = #tpu.pipeline_mode<synchronous>, transform_indices = @transform_4, window_bounds = array<i64: 3, 1, 128>}, {pipeline_mode = #tpu.pipeline_mode<synchronous>, transform_indices = @transform_5, window_bounds = array<i64: 128, 128>}]} {
    %c0 = arith.constant 0 : index
    %c0_0 = arith.constant 0 : index
    %0 = vector.load %arg2[%c0, %c0_0] : memref<128x128xbf16, #tpu.memory_space<vmem>>, vector<128x128xbf16>
    %c0_1 = arith.constant 0 : index
    %c0_2 = arith.constant 0 : index
    %1 = vector.load %arg3[%c0_1, %c0_2] : memref<128x1xf32, #tpu.memory_space<vmem>>, vector<128x1xf32>
    %c0_3 = arith.constant 0 : index
    %c0_4 = arith.constant 0 : index
    %2 = vector.load %arg1[%c0_3, %c0_4] : memref<128x128xbf16, #tpu.memory_space<vmem>>, vector<128x128xbf16>
    %c0_5 = arith.constant 0 : index
    %c0_6 = arith.constant 0 : index
    %c0_7 = arith.constant 0 : index
    %3 = vector.load %arg4[%c0_5, %c0_6, %c0_7] : memref<3x128x128xbf16, #tpu.memory_space<vmem>>, vector<1x128x128xbf16>
    %4 = vector.shape_cast %3 : vector<1x128x128xbf16> to vector<128x128xbf16>
    %cst = arith.constant dense<0.000000e+00> : vector<128x128xf32>
    %5 = tpu.matmul %2, %4, %cst {dimension_numbers = #tpu.dot_dimension_numbers<[1], [0], [0], [1], [0, 0, 1, 1], [], []>} : vector<128x128xbf16>, vector<128x128xbf16>, vector<128x128xf32> -> vector<128x128xf32>
    %6 = vector.broadcast %1 : vector<128x1xf32> to vector<128x128xf32>
    %7 = arith.mulf %5, %6 : vector<128x128xf32>
    %8 = arith.truncf %7 : vector<128x128xf32> to vector<128x128xbf16>
    %cst_8 = arith.constant dense<0.000000e+00> : vector<128x128xf32>
    %9 = tpu.matmul %0, %8, %cst_8 {dimension_numbers = #tpu.dot_dimension_numbers<[1], [0], [0], [1], [0, 0, 1, 1], [], []>} : vector<128x128xbf16>, vector<128x128xbf16>, vector<128x128xf32> -> vector<128x128xf32>
    %10 = vector.broadcast %1 : vector<128x1xf32> to vector<128x128xf32>
    %11 = arith.mulf %9, %10 : vector<128x128xf32>
    %c0_9 = arith.constant 0 : index
    %c0_10 = arith.constant 0 : index
    %c0_11 = arith.constant 0 : index
    %12 = vector.load %arg5[%c0_9, %c0_10, %c0_11] : memref<3x1x128xf32, #tpu.memory_space<vmem>>, vector<1x1x128xf32>
    %13 = vector.shape_cast %12 : vector<1x1x128xf32> to vector<1x128xf32>
    %14 = vector.broadcast %13 : vector<1x128xf32> to vector<128x128xf32>
    %15 = arith.addf %11, %14 : vector<128x128xf32>
    %cst_12 = arith.constant 0.000000e+00 : f32
    %16 = vector.broadcast %cst_12 : f32 to vector<128x128xf32>
    %17 = arith.maximumf %15, %16 : vector<128x128xf32>
    %18 = arith.truncf %17 : vector<128x128xf32> to vector<128x128xbf16>
    %c1 = arith.constant 1 : index
    %c0_13 = arith.constant 0 : index
    %c0_14 = arith.constant 0 : index
    %19 = vector.load %arg4[%c1, %c0_13, %c0_14] : memref<3x128x128xbf16, #tpu.memory_space<vmem>>, vector<1x128x128xbf16>
    %20 = vector.shape_cast %19 : vector<1x128x128xbf16> to vector<128x128xbf16>
    %cst_15 = arith.constant dense<0.000000e+00> : vector<128x128xf32>
    %21 = tpu.matmul %18, %20, %cst_15 {dimension_numbers = #tpu.dot_dimension_numbers<[1], [0], [0], [1], [0, 0, 1, 1], [], []>} : vector<128x128xbf16>, vector<128x128xbf16>, vector<128x128xf32> -> vector<128x128xf32>
    %22 = vector.broadcast %1 : vector<128x1xf32> to vector<128x128xf32>
    %23 = arith.mulf %21, %22 : vector<128x128xf32>
    %24 = arith.truncf %23 : vector<128x128xf32> to vector<128x128xbf16>
    %cst_16 = arith.constant dense<0.000000e+00> : vector<128x128xf32>
    %25 = tpu.matmul %0, %24, %cst_16 {dimension_numbers = #tpu.dot_dimension_numbers<[1], [0], [0], [1], [0, 0, 1, 1], [], []>} : vector<128x128xbf16>, vector<128x128xbf16>, vector<128x128xf32> -> vector<128x128xf32>
    %26 = vector.broadcast %1 : vector<128x1xf32> to vector<128x128xf32>
    %27 = arith.mulf %25, %26 : vector<128x128xf32>
    %c1_17 = arith.constant 1 : index
    %c0_18 = arith.constant 0 : index
    %c0_19 = arith.constant 0 : index
    %28 = vector.load %arg5[%c1_17, %c0_18, %c0_19] : memref<3x1x128xf32, #tpu.memory_space<vmem>>, vector<1x1x128xf32>
    %29 = vector.shape_cast %28 : vector<1x1x128xf32> to vector<1x128xf32>
    %30 = vector.broadcast %29 : vector<1x128xf32> to vector<128x128xf32>
    %31 = arith.addf %27, %30 : vector<128x128xf32>
    %cst_20 = arith.constant 0.000000e+00 : f32
    %32 = vector.broadcast %cst_20 : f32 to vector<128x128xf32>
    %33 = arith.maximumf %31, %32 : vector<128x128xf32>
    %34 = arith.truncf %33 : vector<128x128xf32> to vector<128x128xbf16>
    %c2 = arith.constant 2 : index
    %c0_21 = arith.constant 0 : index
    %c0_22 = arith.constant 0 : index
    %35 = vector.load %arg4[%c2, %c0_21, %c0_22] : memref<3x128x128xbf16, #tpu.memory_space<vmem>>, vector<1x128x128xbf16>
    %36 = vector.shape_cast %35 : vector<1x128x128xbf16> to vector<128x128xbf16>
    %cst_23 = arith.constant dense<0.000000e+00> : vector<128x128xf32>
    %37 = tpu.matmul %34, %36, %cst_23 {dimension_numbers = #tpu.dot_dimension_numbers<[1], [0], [0], [1], [0, 0, 1, 1], [], []>} : vector<128x128xbf16>, vector<128x128xbf16>, vector<128x128xf32> -> vector<128x128xf32>
    %38 = vector.broadcast %1 : vector<128x1xf32> to vector<128x128xf32>
    %39 = arith.mulf %37, %38 : vector<128x128xf32>
    %40 = arith.truncf %39 : vector<128x128xf32> to vector<128x128xbf16>
    %cst_24 = arith.constant dense<0.000000e+00> : vector<128x128xf32>
    %41 = tpu.matmul %0, %40, %cst_24 {dimension_numbers = #tpu.dot_dimension_numbers<[1], [0], [0], [1], [0, 0, 1, 1], [], []>} : vector<128x128xbf16>, vector<128x128xbf16>, vector<128x128xf32> -> vector<128x128xf32>
    %42 = vector.broadcast %1 : vector<128x1xf32> to vector<128x128xf32>
    %43 = arith.mulf %41, %42 : vector<128x128xf32>
    %c2_25 = arith.constant 2 : index
    %c0_26 = arith.constant 0 : index
    %c0_27 = arith.constant 0 : index
    %44 = vector.load %arg5[%c2_25, %c0_26, %c0_27] : memref<3x1x128xf32, #tpu.memory_space<vmem>>, vector<1x1x128xf32>
    %45 = vector.shape_cast %44 : vector<1x1x128xf32> to vector<1x128xf32>
    %46 = vector.broadcast %45 : vector<1x128xf32> to vector<128x128xf32>
    %47 = arith.addf %43, %46 : vector<128x128xf32>
    %c0_28 = arith.constant 0 : index
    %c0_29 = arith.constant 0 : index
    %48 = vector.load %arg6[%c0_28, %c0_29] : memref<128x128xf32, #tpu.memory_space<vmem>>, vector<128x128xf32>
    tpu.vector_store %arg6[%c0_28, %c0_29], %47 {strides = array<i32>} : memref<128x128xf32, #tpu.memory_space<vmem>>, vector<128x128xf32>,
    return
  }
  func.func @transform_0(%arg0: i32) -> (i32, i32) {
    %c0_i32 = arith.constant 0 : i32
    %c0_i32_0 = arith.constant 0 : i32
    %c0_i32_1 = arith.constant 0 : i32
    return %c0_i32, %c0_i32_0 : i32, i32
  }
  func.func @transform_1(%arg0: i32) -> (i32, i32) {
    %c0_i32 = arith.constant 0 : i32
    %c0_i32_0 = arith.constant 0 : i32
    %c0_i32_1 = arith.constant 0 : i32
    return %c0_i32, %c0_i32_0 : i32, i32
  }
  func.func @transform_2(%arg0: i32) -> (i32, i32) {
    %c0_i32 = arith.constant 0 : i32
    %c0_i32_0 = arith.constant 0 : i32
    %c0_i32_1 = arith.constant 0 : i32
    return %c0_i32, %c0_i32_0 : i32, i32
  }
  func.func @transform_3(%arg0: i32) -> (i32, i32, i32) {
    %c0_i32 = arith.constant 0 : i32
    %c0_i32_0 = arith.constant 0 : i32
    %c0_i32_1 = arith.constant 0 : i32
    %c0_i32_2 = arith.constant 0 : i32
    return %c0_i32, %c0_i32_0, %c0_i32_1 : i32, i32, i32
  }
  func.func @transform_4(%arg0: i32) -> (i32, i32, i32) {
    %c0_i32 = arith.constant 0 : i32
    %c0_i32_0 = arith.constant 0 : i32
    %c0_i32_1 = arith.constant 0 : i32
    %c0_i32_2 = arith.constant 0 : i32
    return %c0_i32, %c0_i32_0, %c0_i32_1 : i32, i32, i32
  }
  func.func @transform_5(%arg0: i32) -> (i32, i32) {
    %c0_i32 = arith.constant 0 : i32
    %c0_i32_0 = arith.constant 0 : i32
    %c0_i32_1 = arith.constant 0 : i32
    return %c0_i32, %c0_i32_0 : i32, i32
  }
}

</mosaic_0001>

<llo_original>
// kernel: tpu_custom_call.1
$region0: #{tpu_custom_call.1}
  #allocation0 [shape = 'u32[]', space=smem, size = 0x4, offset = 0x4, fixed_abs, tag = 'smem constant byte address 0x4 - core index']
  #allocation1 [shape = 'u32[144,128]{1,0:T(1,128)}', space=vmem, size = 0x12000, scoped, tag = 'internal scratch']
  %s0 = inlined_call_operand.vmem [shape: bf16[128,128], index: 0, kind: input, shape index: {}]
  %s1 = inlined_call_operand.vmem [shape: bf16[128,128], index: 1, kind: input, shape index: {}]
  %s2 = inlined_call_operand.vmem [shape: f32[128,1], index: 2, kind: input, shape index: {}]
  %s3 = inlined_call_operand.hbm [shape: bf16[3,128,128], index: 3, kind: input, shape index: {}]
  %s4 = inlined_call_operand.vmem [shape: f32[3,1,128], index: 4, kind: input, shape index: {}]
  %s5 = inlined_call_operand.hbm [shape: f32[128,128], index: 5, kind: output, shape index: {}]
  %s6 = sld [smem:[#allocation0]]
  $region34: #{tpu_custom_call.1} parent=0
    _
  %s8 = ssub.s32 1, %s6
  %s9 = scalar_select 0, %s8, %s6
  $region1: #{tpu_custom_call.1} parent=0
    #allocation2 [shape = 'u8[98304]{0}', space=vmem, size = 0x18000, scoped, tag = 'input window, operand 3, single buffered']
    #allocation3 [shape = 's32[1]{0}', space=sflag, size = 0x4, scoped, tag = 'scoped memory for tpu_custom_call.1']
    #allocation4 [shape = 's32[1]{0}', space=sflag, size = 0x4, scoped, tag = 'scoped memory for tpu_custom_call.1']
    #allocation5 [shape = 'u8[65536]{0}', space=vmem, size = 0x10000, scoped, tag = 'output window, operand 0, single buffered']
    %10 = vsyncpa [#allocation3], 0
    %11 = vsyncpa [#allocation4], 0
    // Predicated region
    $region2: #{tpu_custom_call.1} parent=1 // pred_check
      _
    $region3: #{tpu_custom_call.1} parent=1 // pred_check_branch
      %13 = sbr.rel (0) target = $region5
    $region4: #{tpu_custom_call.1} parent=1 // pred_region
      _
    $region5: #{tpu_custom_call.1} parent=1 // pred_fallthru
      _
    // Predicated region
    $region6: #{tpu_custom_call.1} parent=1 // pred_check
      _
    $region7: #{tpu_custom_call.1} parent=1 // pred_check_branch
      %15 = sbr.rel (0) target = $region9
    $region8: #{tpu_custom_call.1} parent=1 // pred_region
      _
    $region9: #{tpu_custom_call.1} parent=1 // pred_fallthru
      _
    // Predicated region
    $region10: #{tpu_custom_call.1} parent=1 // pred_check
      _
    $region11: #{tpu_custom_call.1} parent=1 // pred_check_branch
      %17 = sbr.rel (0) target = $region13
    $region12: #{tpu_custom_call.1} parent=1 // pred_region
      _
    $region13: #{tpu_custom_call.1} parent=1 // pred_fallthru
      _
    // Predicated region
    $region14: #{tpu_custom_call.1} parent=1 // pred_check
      _
    $region15: #{tpu_custom_call.1} parent=1 // pred_check_branch
      %19 = sbr.rel (0) target = $region17
    $region16: #{tpu_custom_call.1} parent=1 // pred_region
      %s21 = ssub.s32 3072, 3072
      %22 = vsyncadd [#allocation3], %s21
      %s23 = sshll.u32 [#allocation2], 4
      %s24 = int_to_ptr.vmem [resolvable:$true] %s23
      %29 = dma.hbm_to_vmem [thread:$0]  %s3, 3072, %s24, [#allocation3], 64, 64, 4
    $region17: #{tpu_custom_call.1} parent=1 // pred_fallthru
      _
    // Predicated region
    $region18: #{tpu_custom_call.1} parent=1 // pred_check
      _
    $region19: #{tpu_custom_call.1} parent=1 // pred_check_branch
      %31 = sbr.rel (0) target = $region21
    $region20: #{tpu_custom_call.1} parent=1 // pred_region
      _
    $region21: #{tpu_custom_call.1} parent=1 // pred_fallthru
      _
    // Predicated region
    $region22: #{tpu_custom_call.1} parent=1 // pred_check
      _
    $region23: #{tpu_custom_call.1} parent=1 // pred_check_branch
      %33 = sbr.rel (0) target = $region25
    $region24: #{tpu_custom_call.1} parent=1 // pred_region
      %34 = dma.done [#allocation3], 3072
    $region25: #{tpu_custom_call.1} parent=1 // pred_fallthru
      _
    %v36 = vld [vmem:[%s1] sm:$0xf]
    %v37 = vld [vmem:[%s1 + $0x4] sm:$0xf]
    %v38 = vld [vmem:[%s1 + $0x8] sm:$0xf]
    %v39 = vld [vmem:[%s1 + $0xc] sm:$0xf]
    %v40 = vld [vmem:[%s1 + $0x10] sm:$0xf]
    %v41 = vld [vmem:[%s1 + $0x14] sm:$0xf]
    %v42 = vld [vmem:[%s1 + $0x18] sm:$0xf]
    %v43 = vld [vmem:[%s1 + $0x1c] sm:$0xf]
    %v44 = vld [vmem:[%s1 + $0x20] sm:$0xf]
    %v45 = vld [vmem:[%s1 + $0x24] sm:$0xf]
    %v46 = vld [vmem:[%s1 + $0x28] sm:$0xf]
    %v47 = vld [vmem:[%s1 + $0x2c] sm:$0xf]
    %v48 = vld [vmem:[%s1 + $0x30] sm:$0xf]
    %v49 = vld [vmem:[%s1 + $0x34] sm:$0xf]
    %v50 = vld [vmem:[%s1 + $0x38] sm:$0xf]
    %v51 = vld [vmem:[%s1 + $0x3c] sm:$0xf]
    %v52 = vld [vmem:[%s2] sm:$0xff]
    %v53 = vld [vmem:[%s2 + $0x8] sm:$0xff]
    %v54 = vld [vmem:[%s2 + $0x10] sm:$0xff]
    %v55 = vld [vmem:[%s2 + $0x18] sm:$0xff]
    %v56 = vld [vmem:[%s2 + $0x20] sm:$0xff]
    %v57 = vld [vmem:[%s2 + $0x28] sm:$0xff]
    %v58 = vld [vmem:[%s2 + $0x30] sm:$0xff]
    %v59 = vld [vmem:[%s2 + $0x38] sm:$0xff]
    %v60 = vld [vmem:[%s2 + $0x40] sm:$0xff]
    %v61 = vld [vmem:[%s2 + $0x48] sm:$0xff]
    %v62 = vld [vmem:[%s2 + $0x50] sm:$0xff]
    %v63 = vld [vmem:[%s2 + $0x58] sm:$0xff]
    %v64 = vld [vmem:[%s2 + $0x60] sm:$0xff]
    %v65 = vld [vmem:[%s2 + $0x68] sm:$0xff]
    %v66 = vld [vmem:[%s2 + $0x70] sm:$0xff]
    %v67 = vld [vmem:[%s2 + $0x78] sm:$0xff]
    %v68 = vld [vmem:[%s0] sm:$0xf]
    %v69 = vld [vmem:[%s0 + $0x4] sm:$0xf]
    %v70 = vld [vmem:[%s0 + $0x8] sm:$0xf]
    %v71 = vld [vmem:[%s0 + $0xc] sm:$0xf]
    %v72 = vld [vmem:[%s0 + $0x10] sm:$0xf]
    %v73 = vld [vmem:[%s0 + $0x14] sm:$0xf]
    %v74 = vld [vmem:[%s0 + $0x18] sm:$0xf]
    %v75 = vld [vmem:[%s0 + $0x1c] sm:$0xf]
    %v76 = vld [vmem:[%s0 + $0x20] sm:$0xf]
    %v77 = vld [vmem:[%s0 + $0x24] sm:$0xf]
    %v78 = vld [vmem:[%s0 + $0x28] sm:$0xf]
    %v79 = vld [vmem:[%s0 + $0x2c] sm:$0xf]
    %v80 = vld [vmem:[%s0 + $0x30] sm:$0xf]
    %v81 = vld [vmem:[%s0 + $0x34] sm:$0xf]
    %v82 = vld [vmem:[%s0 + $0x38] sm:$0xf]
    %v83 = vld [vmem:[%s0 + $0x3c] sm:$0xf]
    %v84 = vld [vmem:[#allocation2] sm:$0xf]
    %v85 = vld [vmem:[#allocation2 + $0x4] sm:$0xf]
    %v86 = vld [vmem:[#allocation2 + $0x8] sm:$0xf]
    %v87 = vld [vmem:[#allocation2 + $0xc] sm:$0xf]
    %v88 = vld [vmem:[#allocation2 + $0x10] sm:$0xf]
    %v89 = vld [vmem:[#allocation2 + $0x14] sm:$0xf]
    %v90 = vld [vmem:[#allocation2 + $0x18] sm:$0xf]
    %v91 = vld [vmem:[#allocation2 + $0x1c] sm:$0xf]
    %v92 = vld [vmem:[#allocation2 + $0x20] sm:$0xf]
    %v93 = vld [vmem:[#allocation2 + $0x24] sm:$0xf]
    %v94 = vld [vmem:[#allocation2 + $0x28] sm:$0xf]
    %v95 = vld [vmem:[#allocation2 + $0x2c] sm:$0xf]
    %v96 = vld [vmem:[#allocation2 + $0x30] sm:$0xf]
    %v97 = vld [vmem:[#allocation2 + $0x34] sm:$0xf]
    %v98 = vld [vmem:[#allocation2 + $0x38] sm:$0xf]
    %v99 = vld [vmem:[#allocation2 + $0x3c] sm:$0xf]
    %v116 = vunpack.c.l.b16 %v68
    %v117 = vunpack.c.l.b16 %v69
    %v118 = vunpack.c.l.b16 %v70
    %v119 = vunpack.c.l.b16 %v71
    %v120 = vunpack.c.l.b16 %v72
    %v121 = vunpack.c.l.b16 %v73
    %v122 = vunpack.c.l.b16 %v74
    %v123 = vunpack.c.l.b16 %v75
    %v124 = vunpack.c.l.b16 %v76
    %v125 = vunpack.c.l.b16 %v77
    %v126 = vunpack.c.l.b16 %v78
    %v127 = vunpack.c.l.b16 %v79
    %v128 = vunpack.c.l.b16 %v80
    %v129 = vunpack.c.l.b16 %v81
    %v130 = vunpack.c.l.b16 %v82
    %v131 = vunpack.c.l.b16 %v83
    %v132 = vpack.c.b16 %v117, %v116
    %v133 = vpack.c.b16 %v119, %v118
    %v134 = vpack.c.b16 %v121, %v120
    %v135 = vpack.c.b16 %v123, %v122
    %v136 = vpack.c.b16 %v125, %v124
    %v137 = vpack.c.b16 %v127, %v126
    %v138 = vpack.c.b16 %v129, %v128
    %v139 = vpack.c.b16 %v131, %v130
    %v164 = vunpack.c.l.b16 %v84
    %v165 = vunpack.c.l.b16 %v85
    %v166 = vunpack.c.l.b16 %v86
    %v167 = vunpack.c.l.b16 %v87
    %v168 = vunpack.c.l.b16 %v88
    %v169 = vunpack.c.l.b16 %v89
    %v170 = vunpack.c.l.b16 %v90
    %v171 = vunpack.c.l.b16 %v91
    %v172 = vunpack.c.l.b16 %v92
    %v173 = vunpack.c.l.b16 %v93
    %v174 = vunpack.c.l.b16 %v94
    %v175 = vunpack.c.l.b16 %v95
    %v176 = vunpack.c.l.b16 %v96
    %v177 = vunpack.c.l.b16 %v97
    %v178 = vunpack.c.l.b16 %v98
    %v179 = vunpack.c.l.b16 %v99
    %v180 = vpack.c.b16 %v165, %v164
    %v181 = vpack.c.b16 %v167, %v166
    %v182 = vpack.c.b16 %v169, %v168
    %v183 = vpack.c.b16 %v171, %v170
    %v184 = vpack.c.b16 %v173, %v172
    %v185 = vpack.c.b16 %v175, %v174
    %v186 = vpack.c.b16 %v177, %v176
    %v187 = vpack.c.b16 %v179, %v178
    %196 = vmatprep.subr.bf16.mxu0 0
    %197 = vmatpush1.bf16.msra.mxu0 %v187
    %198 = vmatprep.subr.bf16.mxu0 0
    %199 = vmatpush1.bf16.msra.mxu0 %v186
    %200 = vmatprep.subr.bf16.mxu0 0
    %201 = vmatpush1.bf16.msra.mxu0 %v185
    %202 = vmatprep.subr.bf16.mxu0 0
    %203 = vmatpush1.bf16.msra.mxu0 %v184
    %204 = vmatprep.subr.bf16.mxu0 0
    %205 = vmatpush1.bf16.msra.mxu0 %v183
    %206 = vmatprep.subr.bf16.mxu0 0
    %207 = vmatpush1.bf16.msra.mxu0 %v182
    %208 = vmatprep.subr.bf16.mxu0 0
    %209 = vmatpush1.bf16.msra.mxu0 %v181
    %210 = vmatprep.subr.bf16.mxu0 0
    %211 = vmatpush1.bf16.msra.mxu0 %v180
    %212 = vmatprep.subr.bf16.mxu0 0
    %213 = vmatpush2.bf16.msra.mxu0 0
    %214 = vmatprep.subr.bf16.mxu0 0
    %215 = vmatpush2.bf16.msra.mxu0 0
    %216 = vmatprep.subr.bf16.mxu0 0
    %217 = vmatpush2.bf16.msra.mxu0 0
    %218 = vmatprep.subr.bf16.mxu0 0
    %219 = vmatpush2.bf16.msra.mxu0 0
    %220 = vmatprep.subr.bf16.mxu0 0
    %221 = vmatpush2.bf16.msra.mxu0 0
    %222 = vmatprep.subr.bf16.mxu0 0
    %223 = vmatpush2.bf16.msra.mxu0 0
    %224 = vmatprep.subr.bf16.mxu0 0
    %225 = vmatpush2.bf16.msra.mxu0 0
    %226 = vmatprep.subr.bf16.mxu0 0
    %227 = vmatpush2.bf16.msra.mxu0 0
    %228 = vmatprep.mubr.bf16.mxu0 0
    %229 = vmatmul.mubr.bf16.gmra.mxu0 %v132
    %v230 = vpop.f32.mrf.mxu0
    %v231 = vadd.f32 0.0, %v230
    %v232 = vpop.f32.mrf.mxu0
    %v233 = vpop.f32.mrf.mxu0
    %v234 = vadd.f32 0.0, %v233
    %v235 = vpop.f32.mrf.mxu0
    %236 = vmatprep.mubr.bf16.mxu0 0
    %237 = vmatmul.mubr.bf16.gmra.mxu0 %v133
    %v238 = vpop.f32.mrf.mxu0
    %v239 = vadd.f32 0.0, %v238
    %v240 = vpop.f32.mrf.mxu0
    %v241 = vpop.f32.mrf.mxu0
    %v242 = vadd.f32 0.0, %v241
    %v243 = vpop.f32.mrf.mxu0
    %244 = vmatprep.mubr.bf16.mxu0 0
    %245 = vmatmul.mubr.bf16.gmra.mxu0 %v134
    %v246 = vpop.f32.mrf.mxu0
    %v247 = vadd.f32 0.0, %v246
    %v248 = vpop.f32.mrf.mxu0
    %v249 = vpop.f32.mrf.mxu0
    %v250 = vadd.f32 0.0, %v249
    %v251 = vpop.f32.mrf.mxu0
    %252 = vmatprep.mubr.bf16.mxu0 0
    %253 = vmatmul.mubr.bf16.gmra.mxu0 %v135
    %v254 = vpop.f32.mrf.mxu0
    %v255 = vadd.f32 0.0, %v254
    %v256 = vpop.f32.mrf.mxu0
    %v257 = vpop.f32.mrf.mxu0
    %v258 = vadd.f32 0.0, %v257
    %v259 = vpop.f32.mrf.mxu0
    %260 = vmatprep.mubr.bf16.mxu0 0
    %261 = vmatmul.mubr.bf16.gmra.mxu0 %v136
    %v262 = vpop.f32.mrf.mxu0
    %v263 = vadd.f32 0.0, %v262
    %v264 = vpop.f32.mrf.mxu0
    %v265 = vpop.f32.mrf.mxu0
    %v266 = vadd.f32 0.0, %v265
    %v267 = vpop.f32.mrf.mxu0
    %268 = vmatprep.mubr.bf16.mxu0 0
    %269 = vmatmul.mubr.bf16.gmra.mxu0 %v137
    %v270 = vpop.f32.mrf.mxu0
    %v271 = vadd.f32 0.0, %v270
    %v272 = vpop.f32.mrf.mxu0
    %v273 = vpop.f32.mrf.mxu0
    %v274 = vadd.f32 0.0, %v273
    %v275 = vpop.f32.mrf.mxu0
    %276 = vmatprep.mubr.bf16.mxu0 0
    %277 = vmatmul.mubr.bf16.gmra.mxu0 %v138
    %v278 = vpop.f32.mrf.mxu0
    %v279 = vadd.f32 0.0, %v278
    %v280 = vpop.f32.mrf.mxu0
    %v281 = vpop.f32.mrf.mxu0
    %v282 = vadd.f32 0.0, %v281
    %v283 = vpop.f32.mrf.mxu0
    %284 = vmatprep.mubr.bf16.mxu0 0
    %285 = vmatmul.mubr.bf16.gmra.mxu0 %v139
    %v286 = vpop.f32.mrf.mxu0
    %v287 = vadd.f32 0.0, %v286
    %v288 = vpop.f32.mrf.mxu0
    %v289 = vpop.f32.mrf.mxu0
    %v290 = vadd.f32 0.0, %v289
    %v291 = vpop.f32.mrf.mxu0
    %292 = vdwg.mxu0
    %294 = vset.pattern.permute.xlu0 0
    %295 = vperm.xlu0 %294, %v52
    %v296 = vpop.permute.xlu0 %295
    %299 = vset.pattern.permute.xlu0 0
    %300 = vperm.xlu0 %299, %v53
    %v301 = vpop.permute.xlu0 %300
    %304 = vset.pattern.permute.xlu0 0
    %305 = vperm.xlu0 %304, %v54
    %v306 = vpop.permute.xlu0 %305
    %309 = vset.pattern.permute.xlu0 0
    %310 = vperm.xlu0 %309, %v55
    %v311 = vpop.permute.xlu0 %310
    %314 = vset.pattern.permute.xlu0 0
    %315 = vperm.xlu0 %314, %v56
    %v316 = vpop.permute.xlu0 %315
    %319 = vset.pattern.permute.xlu0 0
    %320 = vperm.xlu0 %319, %v57
    %v321 = vpop.permute.xlu0 %320
    %324 = vset.pattern.permute.xlu0 0
    %325 = vperm.xlu0 %324, %v58
    %v326 = vpop.permute.xlu0 %325
    %329 = vset.pattern.permute.xlu0 0
    %330 = vperm.xlu0 %329, %v59
    %v331 = vpop.permute.xlu0 %330
    %334 = vset.pattern.permute.xlu0 0
    %335 = vperm.xlu0 %334, %v60
    %v336 = vpop.permute.xlu0 %335
    %339 = vset.pattern.permute.xlu0 0
    %340 = vperm.xlu0 %339, %v61
    %v341 = vpop.permute.xlu0 %340
    %344 = vset.pattern.permute.xlu0 0
    %345 = vperm.xlu0 %344, %v62
    %v346 = vpop.permute.xlu0 %345
    %349 = vset.pattern.permute.xlu0 0
    %350 = vperm.xlu0 %349, %v63
    %v351 = vpop.permute.xlu0 %350
    %354 = vset.pattern.permute.xlu0 0
    %355 = vperm.xlu0 %354, %v64
    %v356 = vpop.permute.xlu0 %355
    %359 = vset.pattern.permute.xlu0 0
    %360 = vperm.xlu0 %359, %v65
    %v361 = vpop.permute.xlu0 %360
    %364 = vset.pattern.permute.xlu0 0
    %365 = vperm.xlu0 %364, %v66
    %v366 = vpop.permute.xlu0 %365
    %369 = vset.pattern.permute.xlu0 0
    %370 = vperm.xlu0 %369, %v67
    %v371 = vpop.permute.xlu0 %370
    %v373 = vmul.f32 %v231, %v296
    %v374 = vmul.f32 %v234, %v301
    %v375 = vmul.f32 %v239, %v306
    %v376 = vmul.f32 %v242, %v311
    %v377 = vmul.f32 %v247, %v316
    %v378 = vmul.f32 %v250, %v321
    %v379 = vmul.f32 %v255, %v326
    %v380 = vmul.f32 %v258, %v331
    %v381 = vmul.f32 %v263, %v336
    %v382 = vmul.f32 %v266, %v341
    %v383 = vmul.f32 %v271, %v346
    %v384 = vmul.f32 %v274, %v351
    %v385 = vmul.f32 %v279, %v356
    %v386 = vmul.f32 %v282, %v361
    %v387 = vmul.f32 %v287, %v366
    %v388 = vmul.f32 %v290, %v371
    %v389 = vpack.c.bf16 %v374, %v373
    %v390 = vpack.c.bf16 %v376, %v375
    %v391 = vpack.c.bf16 %v378, %v377
    %v392 = vpack.c.bf16 %v380, %v379
    %v393 = vpack.c.bf16 %v382, %v381
    %v394 = vpack.c.bf16 %v384, %v383
    %v395 = vpack.c.bf16 %v386, %v385
    %v396 = vpack.c.bf16 %v388, %v387
    %v413 = vunpack.c.l.b16 %v36
    %v414 = vunpack.c.l.b16 %v37
    %v415 = vunpack.c.l.b16 %v38
    %v416 = vunpack.c.l.b16 %v39
    %v417 = vunpack.c.l.b16 %v40
    %v418 = vunpack.c.l.b16 %v41
    %v419 = vunpack.c.l.b16 %v42
    %v420 = vunpack.c.l.b16 %v43
    %v421 = vunpack.c.l.b16 %v44
    %v422 = vunpack.c.l.b16 %v45
    %v423 = vunpack.c.l.b16 %v46
    %v424 = vunpack.c.l.b16 %v47
    %v425 = vunpack.c.l.b16 %v48
    %v426 = vunpack.c.l.b16 %v49
    %v427 = vunpack.c.l.b16 %v50
    %v428 = vunpack.c.l.b16 %v51
    %v429 = vpack.c.b16 %v414, %v413
    %v430 = vpack.c.b16 %v416, %v415
    %v431 = vpack.c.b16 %v418, %v417
    %v432 = vpack.c.b16 %v420, %v419
    %v433 = vpack.c.b16 %v422, %v421
    %v434 = vpack.c.b16 %v424, %v423
    %v435 = vpack.c.b16 %v426, %v425
    %v436 = vpack.c.b16 %v428, %v427
    %445 = vmatprep.subr.bf16.mxu0 0
    %446 = vmatpush1.bf16.msra.mxu0 %v396
    %447 = vmatprep.subr.bf16.mxu0 0
    %448 = vmatpush1.bf16.msra.mxu0 %v395
    %449 = vmatprep.subr.bf16.mxu0 0
    %450 = vmatpush1.bf16.msra.mxu0 %v394
    %451 = vmatprep.subr.bf16.mxu0 0
    %452 = vmatpush1.bf16.msra.mxu0 %v393
    %453 = vmatprep.subr.bf16.mxu0 0
    %454 = vmatpush1.bf16.msra.mxu0 %v392
    %455 = vmatprep.subr.bf16.mxu0 0
    %456 = vmatpush1.bf16.msra.mxu0 %v391
    %457 = vmatprep.subr.bf16.mxu0 0
    %458 = vmatpush1.bf16.msra.mxu0 %v390
    %459 = vmatprep.subr.bf16.mxu0 0
    %460 = vmatpush1.bf16.msra.mxu0 %v389
    %461 = vmatprep.subr.bf16.mxu0 0
    %462 = vmatpush2.bf16.msra.mxu0 0
    %463 = vmatprep.subr.bf16.mxu0 0
    %464 = vmatpush2.bf16.msra.mxu0 0
    %465 = vmatprep.subr.bf16.mxu0 0
    %466 = vmatpush2.bf16.msra.mxu0 0
    %467 = vmatprep.subr.bf16.mxu0 0
    %468 = vmatpush2.bf16.msra.mxu0 0
    %469 = vmatprep.subr.bf16.mxu0 0
    %470 = vmatpush2.bf16.msra.mxu0 0
    %471 = vmatprep.subr.bf16.mxu0 0
    %472 = vmatpush2.bf16.msra.mxu0 0
    %473 = vmatprep.subr.bf16.mxu0 0
    %474 = vmatpush2.bf16.msra.mxu0 0
    %475 = vmatprep.subr.bf16.mxu0 0
    %476 = vmatpush2.bf16.msra.mxu0 0
    %477 = vmatprep.mubr.bf16.mxu0 0
    %478 = vmatmul.mubr.bf16.gmra.mxu0 %v429
    %v479 = vpop.f32.mrf.mxu0
    %v480 = vadd.f32 0.0, %v479
    %v481 = vpop.f32.mrf.mxu0
    %v482 = vpop.f32.mrf.mxu0
    %v483 = vadd.f32 0.0, %v482
    %v484 = vpop.f32.mrf.mxu0
    %485 = vmatprep.mubr.bf16.mxu0 0
    %486 = vmatmul.mubr.bf16.gmra.mxu0 %v430
    %v487 = vpop.f32.mrf.mxu0
    %v488 = vadd.f32 0.0, %v487
    %v489 = vpop.f32.mrf.mxu0
    %v490 = vpop.f32.mrf.mxu0
    %v491 = vadd.f32 0.0, %v490
    %v492 = vpop.f32.mrf.mxu0
    %493 = vmatprep.mubr.bf16.mxu0 0
    %494 = vmatmul.mubr.bf16.gmra.mxu0 %v431
    %v495 = vpop.f32.mrf.mxu0
    %v496 = vadd.f32 0.0, %v495
    %v497 = vpop.f32.mrf.mxu0
    %v498 = vpop.f32.mrf.mxu0
    %v499 = vadd.f32 0.0, %v498
    %v500 = vpop.f32.mrf.mxu0
    %501 = vmatprep.mubr.bf16.mxu0 0
    %502 = vmatmul.mubr.bf16.gmra.mxu0 %v432
    %v503 = vpop.f32.mrf.mxu0
    %v504 = vadd.f32 0.0, %v503
    %v505 = vpop.f32.mrf.mxu0
    %v506 = vpop.f32.mrf.mxu0
    %v507 = vadd.f32 0.0, %v506
    %v508 = vpop.f32.mrf.mxu0
    %509 = vmatprep.mubr.bf16.mxu0 0
    %510 = vmatmul.mubr.bf16.gmra.mxu0 %v433
    %v511 = vpop.f32.mrf.mxu0
    %v512 = vadd.f32 0.0, %v511
    %v513 = vpop.f32.mrf.mxu0
    %v514 = vpop.f32.mrf.mxu0
    %v515 = vadd.f32 0.0, %v514
    %v516 = vpop.f32.mrf.mxu0
    %517 = vmatprep.mubr.bf16.mxu0 0
    %518 = vmatmul.mubr.bf16.gmra.mxu0 %v434
    %v519 = vpop.f32.mrf.mxu0
    %v520 = vadd.f32 0.0, %v519
    %v521 = vpop.f32.mrf.mxu0
    %v522 = vpop.f32.mrf.mxu0
    %v523 = vadd.f32 0.0, %v522
    %v524 = vpop.f32.mrf.mxu0
    %525 = vmatprep.mubr.bf16.mxu0 0
    %526 = vmatmul.mubr.bf16.gmra.mxu0 %v435
    %v527 = vpop.f32.mrf.mxu0
    %v528 = vadd.f32 0.0, %v527
    %v529 = vpop.f32.mrf.mxu0
    %v530 = vpop.f32.mrf.mxu0
    %v531 = vadd.f32 0.0, %v530
    %v532 = vpop.f32.mrf.mxu0
    %533 = vmatprep.mubr.bf16.mxu0 0
    %534 = vmatmul.mubr.bf16.gmra.mxu0 %v436
    %v535 = vpop.f32.mrf.mxu0
    %v536 = vadd.f32 0.0, %v535
    %v537 = vpop.f32.mrf.mxu0
    %v538 = vpop.f32.mrf.mxu0
    %v539 = vadd.f32 0.0, %v538
    %v540 = vpop.f32.mrf.mxu0
    %541 = vdwg.mxu0
    %v542 = vmul.f32 %v480, %v296
    %v543 = vmul.f32 %v483, %v301
    %v544 = vmul.f32 %v488, %v306
    %v545 = vmul.f32 %v491, %v311
    %v546 = vmul.f32 %v496, %v316
    %v547 = vmul.f32 %v499, %v321
    %v548 = vmul.f32 %v504, %v326
    %v549 = vmul.f32 %v507, %v331
    %v550 = vmul.f32 %v512, %v336
    %v551 = vmul.f32 %v515, %v341
    %v552 = vmul.f32 %v520, %v346
    %v553 = vmul.f32 %v523, %v351
    %v554 = vmul.f32 %v528, %v356
    %v555 = vmul.f32 %v531, %v361
    %v556 = vmul.f32 %v536, %v366
    %v557 = vmul.f32 %v539, %v371
    %v558 = vld [vmem:[%s4] sm:$0x1]
    %v560 = vlaneseq
    %v561 = vshrl.u32 %v560, 7
    %v562 = vsub.s32 0, %v561
    %v563 = vrot.slane %v558, %v562
    %v565 = vadd.f32 %v542, %v563
    %v566 = vadd.f32 %v543, %v563
    %v567 = vadd.f32 %v544, %v563
    %v568 = vadd.f32 %v545, %v563
    %v569 = vadd.f32 %v546, %v563
    %v570 = vadd.f32 %v547, %v563
    %v571 = vadd.f32 %v548, %v563
    %v572 = vadd.f32 %v549, %v563
    %v573 = vadd.f32 %v550, %v563
    %v574 = vadd.f32 %v551, %v563
    %v575 = vadd.f32 %v552, %v563
    %v576 = vadd.f32 %v553, %v563
    %v577 = vadd.f32 %v554, %v563
    %v578 = vadd.f32 %v555, %v563
    %v579 = vadd.f32 %v556, %v563
    %v580 = vadd.f32 %v557, %v563
    %v581 = vmax.f32 %v565, 0.0
    %v582 = vmax.f32 %v566, 0.0
    %v583 = vmax.f32 %v567, 0.0
    %v584 = vmax.f32 %v568, 0.0
    %v585 = vmax.f32 %v569, 0.0
    %v586 = vmax.f32 %v570, 0.0
    %v587 = vmax.f32 %v571, 0.0
    %v588 = vmax.f32 %v572, 0.0
    %v589 = vmax.f32 %v573, 0.0
    %v590 = vmax.f32 %v574, 0.0
    %v591 = vmax.f32 %v575, 0.0
    %v592 = vmax.f32 %v576, 0.0
    %v593 = vmax.f32 %v577, 0.0
    %v594 = vmax.f32 %v578, 0.0
    %v595 = vmax.f32 %v579, 0.0
    %v596 = vmax.f32 %v580, 0.0
    %v597 = vpack.c.bf16 %v582, %v581
    %v598 = vpack.c.bf16 %v584, %v583
    %v599 = vpack.c.bf16 %v586, %v585
    %v600 = vpack.c.bf16 %v588, %v587
    %v601 = vpack.c.bf16 %v590, %v589
    %v602 = vpack.c.bf16 %v592, %v591
    %v603 = vpack.c.bf16 %v594, %v593
    %v604 = vpack.c.bf16 %v596, %v595
    %s605 = scalar_lea.vmem [#allocation2], 64
    %v606 = vld [vmem:[%s605] sm:$0xf]
    %v607 = vld [vmem:[%s605 + $0x4] sm:$0xf]
    %v608 = vld [vmem:[%s605 + $0x8] sm:$0xf]
    %v609 = vld [vmem:[%s605 + $0xc] sm:$0xf]
    %v610 = vld [vmem:[%s605 + $0x10] sm:$0xf]
    %v611 = vld [vmem:[%s605 + $0x14] sm:$0xf]
    %v612 = vld [vmem:[%s605 + $0x18] sm:$0xf]
    %v613 = vld [vmem:[%s605 + $0x1c] sm:$0xf]
    %v614 = vld [vmem:[%s605 + $0x20] sm:$0xf]
    %v615 = vld [vmem:[%s605 + $0x24] sm:$0xf]
    %v616 = vld [vmem:[%s605 + $0x28] sm:$0xf]
    %v617 = vld [vmem:[%s605 + $0x2c] sm:$0xf]
    %v618 = vld [vmem:[%s605 + $0x30] sm:$0xf]
    %v619 = vld [vmem:[%s605 + $0x34] sm:$0xf]
    %v620 = vld [vmem:[%s605 + $0x38] sm:$0xf]
    %v621 = vld [vmem:[%s605 + $0x3c] sm:$0xf]
    %v638 = vunpack.c.l.b16 %v606
    %v639 = vunpack.c.l.b16 %v607
    %v640 = vunpack.c.l.b16 %v608
    %v641 = vunpack.c.l.b16 %v609
    %v642 = vunpack.c.l.b16 %v610
    %v643 = vunpack.c.l.b16 %v611
    %v644 = vunpack.c.l.b16 %v612
    %v645 = vunpack.c.l.b16 %v613
    %v646 = vunpack.c.l.b16 %v614
    %v647 = vunpack.c.l.b16 %v615
    %v648 = vunpack.c.l.b16 %v616
    %v649 = vunpack.c.l.b16 %v617
    %v650 = vunpack.c.l.b16 %v618
    %v651 = vunpack.c.l.b16 %v619
    %v652 = vunpack.c.l.b16 %v620
    %v653 = vunpack.c.l.b16 %v621
    %v654 = vpack.c.b16 %v639, %v638
    %v655 = vpack.c.b16 %v641, %v640
    %v656 = vpack.c.b16 %v643, %v642
    %v657 = vpack.c.b16 %v645, %v644
    %v658 = vpack.c.b16 %v647, %v646
    %v659 = vpack.c.b16 %v649, %v648
    %v660 = vpack.c.b16 %v651, %v650
    %v661 = vpack.c.b16 %v653, %v652
    %670 = vmatprep.subr.bf16.mxu0 0
    %671 = vmatpush1.bf16.msra.mxu0 %v661
    %672 = vmatprep.subr.bf16.mxu0 0
    %673 = vmatpush1.bf16.msra.mxu0 %v660
    %674 = vmatprep.subr.bf16.mxu0 0
    %675 = vmatpush1.bf16.msra.mxu0 %v659
    %676 = vmatprep.subr.bf16.mxu0 0
    %677 = vmatpush1.bf16.msra.mxu0 %v658
    %678 = vmatprep.subr.bf16.mxu0 0
    %679 = vmatpush1.bf16.msra.mxu0 %v657
    %680 = vmatprep.subr.bf16.mxu0 0
    %681 = vmatpush1.bf16.msra.mxu0 %v656
    %682 = vmatprep.subr.bf16.mxu0 0
    %683 = vmatpush1.bf16.msra.mxu0 %v655
    %684 = vmatprep.subr.bf16.mxu0 0
    %685 = vmatpush1.bf16.msra.mxu0 %v654
    %686 = vmatprep.subr.bf16.mxu0 0
    %687 = vmatpush2.bf16.msra.mxu0 0
    %688 = vmatprep.subr.bf16.mxu0 0
    %689 = vmatpush2.bf16.msra.mxu0 0
    %690 = vmatprep.subr.bf16.mxu0 0
    %691 = vmatpush2.bf16.msra.mxu0 0
    %692 = vmatprep.subr.bf16.mxu0 0
    %693 = vmatpush2.bf16.msra.mxu0 0
    %694 = vmatprep.subr.bf16.mxu0 0
    %695 = vmatpush2.bf16.msra.mxu0 0
    %696 = vmatprep.subr.bf16.mxu0 0
    %697 = vmatpush2.bf16.msra.mxu0 0
    %698 = vmatprep.subr.bf16.mxu0 0
    %699 = vmatpush2.bf16.msra.mxu0 0
    %700 = vmatprep.subr.bf16.mxu0 0
    %701 = vmatpush2.bf16.msra.mxu0 0
    %702 = vmatprep.mubr.bf16.mxu0 0
    %703 = vmatmul.mubr.bf16.gmra.mxu0 %v597
    %v704 = vpop.f32.mrf.mxu0
    %v705 = vadd.f32 0.0, %v704
    %v706 = vpop.f32.mrf.mxu0
    %v707 = vpop.f32.mrf.mxu0
    %v708 = vadd.f32 0.0, %v707
    %v709 = vpop.f32.mrf.mxu0
    %710 = vmatprep.mubr.bf16.mxu0 0
    %711 = vmatmul.mubr.bf16.gmra.mxu0 %v598
    %v712 = vpop.f32.mrf.mxu0
    %v713 = vadd.f32 0.0, %v712
    %v714 = vpop.f32.mrf.mxu0
    %v715 = vpop.f32.mrf.mxu0
    %v716 = vadd.f32 0.0, %v715
    %v717 = vpop.f32.mrf.mxu0
    %718 = vmatprep.mubr.bf16.mxu0 0
    %719 = vmatmul.mubr.bf16.gmra.mxu0 %v599
    %v720 = vpop.f32.mrf.mxu0
    %v721 = vadd.f32 0.0, %v720
    %v722 = vpop.f32.mrf.mxu0
    %v723 = vpop.f32.mrf.mxu0
    %v724 = vadd.f32 0.0, %v723
    %v725 = vpop.f32.mrf.mxu0
    %726 = vmatprep.mubr.bf16.mxu0 0
    %727 = vmatmul.mubr.bf16.gmra.mxu0 %v600
    %v728 = vpop.f32.mrf.mxu0
    %v729 = vadd.f32 0.0, %v728
    %v730 = vpop.f32.mrf.mxu0
    %v731 = vpop.f32.mrf.mxu0
    %v732 = vadd.f32 0.0, %v731
    %v733 = vpop.f32.mrf.mxu0
    %734 = vmatprep.mubr.bf16.mxu0 0
    %735 = vmatmul.mubr.bf16.gmra.mxu0 %v601
    %v736 = vpop.f32.mrf.mxu0
    %v737 = vadd.f32 0.0, %v736
    %v738 = vpop.f32.mrf.mxu0
    %v739 = vpop.f32.mrf.mxu0
    %v740 = vadd.f32 0.0, %v739
    %v741 = vpop.f32.mrf.mxu0
    %742 = vmatprep.mubr.bf16.mxu0 0
    %743 = vmatmul.mubr.bf16.gmra.mxu0 %v602
    %v744 = vpop.f32.mrf.mxu0
    %v745 = vadd.f32 0.0, %v744
    %v746 = vpop.f32.mrf.mxu0
    %v747 = vpop.f32.mrf.mxu0
    %v748 = vadd.f32 0.0, %v747
    %v749 = vpop.f32.mrf.mxu0
    %750 = vmatprep.mubr.bf16.mxu0 0
    %751 = vmatmul.mubr.bf16.gmra.mxu0 %v603
    %v752 = vpop.f32.mrf.mxu0
    %v753 = vadd.f32 0.0, %v752
    %v754 = vpop.f32.mrf.mxu0
    %v755 = vpop.f32.mrf.mxu0
    %v756 = vadd.f32 0.0, %v755
    %v757 = vpop.f32.mrf.mxu0
    %758 = vmatprep.mubr.bf16.mxu0 0
    %759 = vmatmul.mubr.bf16.gmra.mxu0 %v604
    %v760 = vpop.f32.mrf.mxu0
    %v761 = vadd.f32 0.0, %v760
    %v762 = vpop.f32.mrf.mxu0
    %v763 = vpop.f32.mrf.mxu0
    %v764 = vadd.f32 0.0, %v763
    %v765 = vpop.f32.mrf.mxu0
    %766 = vdwg.mxu0
    %v767 = vmul.f32 %v705, %v296
    %v768 = vmul.f32 %v708, %v301
    %v769 = vmul.f32 %v713, %v306
    %v770 = vmul.f32 %v716, %v311
    %v771 = vmul.f32 %v721, %v316
    %v772 = vmul.f32 %v724, %v321
    %v773 = vmul.f32 %v729, %v326
    %v774 = vmul.f32 %v732, %v331
    %v775 = vmul.f32 %v737, %v336
    %v776 = vmul.f32 %v740, %v341
    %v777 = vmul.f32 %v745, %v346
    %v778 = vmul.f32 %v748, %v351
    %v779 = vmul.f32 %v753, %v356
    %v780 = vmul.f32 %v756, %v361
    %v781 = vmul.f32 %v761, %v366
    %v782 = vmul.f32 %v764, %v371
    %v783 = vpack.c.bf16 %v768, %v767
    %v784 = vpack.c.bf16 %v770, %v769
    %v785 = vpack.c.bf16 %v772, %v771
    %v786 = vpack.c.bf16 %v774, %v773
    %v787 = vpack.c.bf16 %v776, %v775
    %v788 = vpack.c.bf16 %v778, %v777
    %v789 = vpack.c.bf16 %v780, %v779
    %v790 = vpack.c.bf16 %v782, %v781
    %791 = vmatprep.subr.bf16.mxu0 0
    %792 = vmatpush1.bf16.msra.mxu0 %v790
    %793 = vmatprep.subr.bf16.mxu0 0
    %794 = vmatpush1.bf16.msra.mxu0 %v789
    %795 = vmatprep.subr.bf16.mxu0 0
    %796 = vmatpush1.bf16.msra.mxu0 %v788
    %797 = vmatprep.subr.bf16.mxu0 0
    %798 = vmatpush1.bf16.msra.mxu0 %v787
    %799 = vmatprep.subr.bf16.mxu0 0
    %800 = vmatpush1.bf16.msra.mxu0 %v786
    %801 = vmatprep.subr.bf16.mxu0 0
    %802 = vmatpush1.bf16.msra.mxu0 %v785
    %803 = vmatprep.subr.bf16.mxu0 0
    %804 = vmatpush1.bf16.msra.mxu0 %v784
    %805 = vmatprep.subr.bf16.mxu0 0
    %806 = vmatpush1.bf16.msra.mxu0 %v783
    %807 = vmatprep.subr.bf16.mxu0 0
    %808 = vmatpush2.bf16.msra.mxu0 0
    %809 = vmatprep.subr.bf16.mxu0 0
    %810 = vmatpush2.bf16.msra.mxu0 0
    %811 = vmatprep.subr.bf16.mxu0 0
    %812 = vmatpush2.bf16.msra.mxu0 0
    %813 = vmatprep.subr.bf16.mxu0 0
    %814 = vmatpush2.bf16.msra.mxu0 0
    %815 = vmatprep.subr.bf16.mxu0 0
    %816 = vmatpush2.bf16.msra.mxu0 0
    %817 = vmatprep.subr.bf16.mxu0 0
    %818 = vmatpush2.bf16.msra.mxu0 0
    %819 = vmatprep.subr.bf16.mxu0 0
    %820 = vmatpush2.bf16.msra.mxu0 0
    %821 = vmatprep.subr.bf16.mxu0 0
    %822 = vmatpush2.bf16.msra.mxu0 0
    %823 = vmatprep.mubr.bf16.mxu0 0
    %824 = vmatmul.mubr.bf16.gmra.mxu0 %v429
    %v825 = vpop.f32.mrf.mxu0
    %v826 = vadd.f32 0.0, %v825
    %v827 = vpop.f32.mrf.mxu0
    %v828 = vpop.f32.mrf.mxu0
    %v829 = vadd.f32 0.0, %v828
    %v830 = vpop.f32.mrf.mxu0
    %831 = vmatprep.mubr.bf16.mxu0 0
    %832 = vmatmul.mubr.bf16.gmra.mxu0 %v430
    %v833 = vpop.f32.mrf.mxu0
    %v834 = vadd.f32 0.0, %v833
    %v835 = vpop.f32.mrf.mxu0
    %v836 = vpop.f32.mrf.mxu0
    %v837 = vadd.f32 0.0, %v836
    %v838 = vpop.f32.mrf.mxu0
    %839 = vmatprep.mubr.bf16.mxu0 0
    %840 = vmatmul.mubr.bf16.gmra.mxu0 %v431
    %v841 = vpop.f32.mrf.mxu0
    %v842 = vadd.f32 0.0, %v841
    %v843 = vpop.f32.mrf.mxu0
    %v844 = vpop.f32.mrf.mxu0
    %v845 = vadd.f32 0.0, %v844
    %v846 = vpop.f32.mrf.mxu0
    %847 = vmatprep.mubr.bf16.mxu0 0
    %848 = vmatmul.mubr.bf16.gmra.mxu0 %v432
    %v849 = vpop.f32.mrf.mxu0
    %v850 = vadd.f32 0.0, %v849
    %v851 = vpop.f32.mrf.mxu0
    %v852 = vpop.f32.mrf.mxu0
    %v853 = vadd.f32 0.0, %v852
    %v854 = vpop.f32.mrf.mxu0
    %855 = vmatprep.mubr.bf16.mxu0 0
    %856 = vmatmul.mubr.bf16.gmra.mxu0 %v433
    %v857 = vpop.f32.mrf.mxu0
    %v858 = vadd.f32 0.0, %v857
    %v859 = vpop.f32.mrf.mxu0
    %v860 = vpop.f32.mrf.mxu0
    %v861 = vadd.f32 0.0, %v860
    %v862 = vpop.f32.mrf.mxu0
    %863 = vmatprep.mubr.bf16.mxu0 0
    %864 = vmatmul.mubr.bf16.gmra.mxu0 %v434
    %v865 = vpop.f32.mrf.mxu0
    %v866 = vadd.f32 0.0, %v865
    %v867 = vpop.f32.mrf.mxu0
    %v868 = vpop.f32.mrf.mxu0
    %v869 = vadd.f32 0.0, %v868
    %v870 = vpop.f32.mrf.mxu0
    %871 = vmatprep.mubr.bf16.mxu0 0
    %872 = vmatmul.mubr.bf16.gmra.mxu0 %v435
    %v873 = vpop.f32.mrf.mxu0
    %v874 = vadd.f32 0.0, %v873
    %v875 = vpop.f32.mrf.mxu0
    %v876 = vpop.f32.mrf.mxu0
    %v877 = vadd.f32 0.0, %v876
    %v878 = vpop.f32.mrf.mxu0
    %879 = vmatprep.mubr.bf16.mxu0 0
    %880 = vmatmul.mubr.bf16.gmra.mxu0 %v436
    %v881 = vpop.f32.mrf.mxu0
    %v882 = vadd.f32 0.0, %v881
    %v883 = vpop.f32.mrf.mxu0
    %v884 = vpop.f32.mrf.mxu0
    %v885 = vadd.f32 0.0, %v884
    %v886 = vpop.f32.mrf.mxu0
    %887 = vdwg.mxu0
    %v888 = vmul.f32 %v826, %v296
    %v889 = vmul.f32 %v829, %v301
    %v890 = vmul.f32 %v834, %v306
    %v891 = vmul.f32 %v837, %v311
    %v892 = vmul.f32 %v842, %v316
    %v893 = vmul.f32 %v845, %v321
    %v894 = vmul.f32 %v850, %v326
    %v895 = vmul.f32 %v853, %v331
    %v896 = vmul.f32 %v858, %v336
    %v897 = vmul.f32 %v861, %v341
    %v898 = vmul.f32 %v866, %v346
    %v899 = vmul.f32 %v869, %v351
    %v900 = vmul.f32 %v874, %v356
    %v901 = vmul.f32 %v877, %v361
    %v902 = vmul.f32 %v882, %v366
    %v903 = vmul.f32 %v885, %v371
    %s904 = scalar_lea.vmem %s4, 1
    %v905 = vld [vmem:[%s904] sm:$0x1]
    %v907 = vlaneseq
    %v908 = vshrl.u32 %v907, 7
    %v909 = vsub.s32 0, %v908
    %v910 = vrot.slane %v905, %v909
    %v912 = vadd.f32 %v888, %v910
    %v913 = vadd.f32 %v889, %v910
    %v914 = vadd.f32 %v890, %v910
    %v915 = vadd.f32 %v891, %v910
    %v916 = vadd.f32 %v892, %v910
    %v917 = vadd.f32 %v893, %v910
    %v918 = vadd.f32 %v894, %v910
    %v919 = vadd.f32 %v895, %v910
    %v920 = vadd.f32 %v896, %v910
    %v921 = vadd.f32 %v897, %v910
    %v922 = vadd.f32 %v898, %v910
    %v923 = vadd.f32 %v899, %v910
    %v924 = vadd.f32 %v900, %v910
    %v925 = vadd.f32 %v901, %v910
    %v926 = vadd.f32 %v902, %v910
    %v927 = vadd.f32 %v903, %v910
    %v928 = vmax.f32 %v912, 0.0
    %v929 = vmax.f32 %v913, 0.0
    %v930 = vmax.f32 %v914, 0.0
    %v931 = vmax.f32 %v915, 0.0
    %v932 = vmax.f32 %v916, 0.0
    %v933 = vmax.f32 %v917, 0.0
    %v934 = vmax.f32 %v918, 0.0
    %v935 = vmax.f32 %v919, 0.0
    %v936 = vmax.f32 %v920, 0.0
    %v937 = vmax.f32 %v921, 0.0
    %v938 = vmax.f32 %v922, 0.0
    %v939 = vmax.f32 %v923, 0.0
    %v940 = vmax.f32 %v924, 0.0
    %v941 = vmax.f32 %v925, 0.0
    %v942 = vmax.f32 %v926, 0.0
    %v943 = vmax.f32 %v927, 0.0
    %v944 = vpack.c.bf16 %v929, %v928
    %v945 = vpack.c.bf16 %v931, %v930
    %v946 = vpack.c.bf16 %v933, %v932
    %v947 = vpack.c.bf16 %v935, %v934
    %v948 = vpack.c.bf16 %v937, %v936
    %v949 = vpack.c.bf16 %v939, %v938
    %v950 = vpack.c.bf16 %v941, %v940
    %v951 = vpack.c.bf16 %v943, %v942
    %s952 = scalar_lea.vmem [#allocation2], 128
    %v953 = vld [vmem:[%s952] sm:$0xf]
    %v954 = vld [vmem:[%s952 + $0x4] sm:$0xf]
    %v955 = vld [vmem:[%s952 + $0x8] sm:$0xf]
    %v956 = vld [vmem:[%s952 + $0xc] sm:$0xf]
    %v957 = vld [vmem:[%s952 + $0x10] sm:$0xf]
    %v958 = vld [vmem:[%s952 + $0x14] sm:$0xf]
    %v959 = vld [vmem:[%s952 + $0x18] sm:$0xf]
    %v960 = vld [vmem:[%s952 + $0x1c] sm:$0xf]
    %v961 = vld [vmem:[%s952 + $0x20] sm:$0xf]
    %v962 = vld [vmem:[%s952 + $0x24] sm:$0xf]
    %v963 = vld [vmem:[%s952 + $0x28] sm:$0xf]
    %v964 = vld [vmem:[%s952 + $0x2c] sm:$0xf]
    %v965 = vld [vmem:[%s952 + $0x30] sm:$0xf]
    %v966 = vld [vmem:[%s952 + $0x34] sm:$0xf]
    %v967 = vld [vmem:[%s952 + $0x38] sm:$0xf]
    %v968 = vld [vmem:[%s952 + $0x3c] sm:$0xf]
    %v985 = vunpack.c.l.b16 %v953
    %v986 = vunpack.c.l.b16 %v954
    %v987 = vunpack.c.l.b16 %v955
    %v988 = vunpack.c.l.b16 %v956
    %v989 = vunpack.c.l.b16 %v957
    %v990 = vunpack.c.l.b16 %v958
    %v991 = vunpack.c.l.b16 %v959
    %v992 = vunpack.c.l.b16 %v960
    %v993 = vunpack.c.l.b16 %v961
    %v994 = vunpack.c.l.b16 %v962
    %v995 = vunpack.c.l.b16 %v963
    %v996 = vunpack.c.l.b16 %v964
    %v997 = vunpack.c.l.b16 %v965
    %v998 = vunpack.c.l.b16 %v966
    %v999 = vunpack.c.l.b16 %v967
    %v1000 = vunpack.c.l.b16 %v968
    %v1001 = vpack.c.b16 %v986, %v985
    %v1002 = vpack.c.b16 %v988, %v987
    %v1003 = vpack.c.b16 %v990, %v989
    %v1004 = vpack.c.b16 %v992, %v991
    %v1005 = vpack.c.b16 %v994, %v993
    %v1006 = vpack.c.b16 %v996, %v995
    %v1007 = vpack.c.b16 %v998, %v997
    %v1008 = vpack.c.b16 %v1000, %v999
    %1017 = vmatprep.subr.bf16.mxu0 0
    %1018 = vmatpush1.bf16.msra.mxu0 %v1008
    %1019 = vmatprep.subr.bf16.mxu0 0
    %1020 = vmatpush1.bf16.msra.mxu0 %v1007
    %1021 = vmatprep.subr.bf16.mxu0 0
    %1022 = vmatpush1.bf16.msra.mxu0 %v1006
    %1023 = vmatprep.subr.bf16.mxu0 0
    %1024 = vmatpush1.bf16.msra.mxu0 %v1005
    %1025 = vmatprep.subr.bf16.mxu0 0
    %1026 = vmatpush1.bf16.msra.mxu0 %v1004
    %1027 = vmatprep.subr.bf16.mxu0 0
    %1028 = vmatpush1.bf16.msra.mxu0 %v1003
    %1029 = vmatprep.subr.bf16.mxu0 0
    %1030 = vmatpush1.bf16.msra.mxu0 %v1002
    %1031 = vmatprep.subr.bf16.mxu0 0
    %1032 = vmatpush1.bf16.msra.mxu0 %v1001
    %1033 = vmatprep.subr.bf16.mxu0 0
    %1034 = vmatpush2.bf16.msra.mxu0 0
    %1035 = vmatprep.subr.bf16.mxu0 0
    %1036 = vmatpush2.bf16.msra.mxu0 0
    %1037 = vmatprep.subr.bf16.mxu0 0
    %1038 = vmatpush2.bf16.msra.mxu0 0
    %1039 = vmatprep.subr.bf16.mxu0 0
    %1040 = vmatpush2.bf16.msra.mxu0 0
    %1041 = vmatprep.subr.bf16.mxu0 0
    %1042 = vmatpush2.bf16.msra.mxu0 0
    %1043 = vmatprep.subr.bf16.mxu0 0
    %1044 = vmatpush2.bf16.msra.mxu0 0
    %1045 = vmatprep.subr.bf16.mxu0 0
    %1046 = vmatpush2.bf16.msra.mxu0 0
    %1047 = vmatprep.subr.bf16.mxu0 0
    %1048 = vmatpush2.bf16.msra.mxu0 0
    %1049 = vmatprep.mubr.bf16.mxu0 0
    %1050 = vmatmul.mubr.bf16.gmra.mxu0 %v944
    %v1051 = vpop.f32.mrf.mxu0
    %v1052 = vadd.f32 0.0, %v1051
    %v1053 = vpop.f32.mrf.mxu0
    %v1054 = vpop.f32.mrf.mxu0
    %v1055 = vadd.f32 0.0, %v1054
    %v1056 = vpop.f32.mrf.mxu0
    %1057 = vmatprep.mubr.bf16.mxu0 0
    %1058 = vmatmul.mubr.bf16.gmra.mxu0 %v945
    %v1059 = vpop.f32.mrf.mxu0
    %v1060 = vadd.f32 0.0, %v1059
    %v1061 = vpop.f32.mrf.mxu0
    %v1062 = vpop.f32.mrf.mxu0
    %v1063 = vadd.f32 0.0, %v1062
    %v1064 = vpop.f32.mrf.mxu0
    %1065 = vmatprep.mubr.bf16.mxu0 0
    %1066 = vmatmul.mubr.bf16.gmra.mxu0 %v946
    %v1067 = vpop.f32.mrf.mxu0
    %v1068 = vadd.f32 0.0, %v1067
    %v1069 = vpop.f32.mrf.mxu0
    %v1070 = vpop.f32.mrf.mxu0
    %v1071 = vadd.f32 0.0, %v1070
    %v1072 = vpop.f32.mrf.mxu0
    %1073 = vmatprep.mubr.bf16.mxu0 0
    %1074 = vmatmul.mubr.bf16.gmra.mxu0 %v947
    %v1075 = vpop.f32.mrf.mxu0
    %v1076 = vadd.f32 0.0, %v1075
    %v1077 = vpop.f32.mrf.mxu0
    %v1078 = vpop.f32.mrf.mxu0
    %v1079 = vadd.f32 0.0, %v1078
    %v1080 = vpop.f32.mrf.mxu0
    %1081 = vmatprep.mubr.bf16.mxu0 0
    %1082 = vmatmul.mubr.bf16.gmra.mxu0 %v948
    %v1083 = vpop.f32.mrf.mxu0
    %v1084 = vadd.f32 0.0, %v1083
    %v1085 = vpop.f32.mrf.mxu0
    %v1086 = vpop.f32.mrf.mxu0
    %v1087 = vadd.f32 0.0, %v1086
    %v1088 = vpop.f32.mrf.mxu0
    %1089 = vmatprep.mubr.bf16.mxu0 0
    %1090 = vmatmul.mubr.bf16.gmra.mxu0 %v949
    %v1091 = vpop.f32.mrf.mxu0
    %v1092 = vadd.f32 0.0, %v1091
    %v1093 = vpop.f32.mrf.mxu0
    %v1094 = vpop.f32.mrf.mxu0
    %v1095 = vadd.f32 0.0, %v1094
    %v1096 = vpop.f32.mrf.mxu0
    %1097 = vmatprep.mubr.bf16.mxu0 0
    %1098 = vmatmul.mubr.bf16.gmra.mxu0 %v950
    %v1099 = vpop.f32.mrf.mxu0
    %v1100 = vadd.f32 0.0, %v1099
    %v1101 = vpop.f32.mrf.mxu0
    %v1102 = vpop.f32.mrf.mxu0
    %v1103 = vadd.f32 0.0, %v1102
    %v1104 = vpop.f32.mrf.mxu0
    %1105 = vmatprep.mubr.bf16.mxu0 0
    %1106 = vmatmul.mubr.bf16.gmra.mxu0 %v951
    %v1107 = vpop.f32.mrf.mxu0
    %v1108 = vadd.f32 0.0, %v1107
    %v1109 = vpop.f32.mrf.mxu0
    %v1110 = vpop.f32.mrf.mxu0
    %v1111 = vadd.f32 0.0, %v1110
    %v1112 = vpop.f32.mrf.mxu0
    %1113 = vdwg.mxu0
    %v1114 = vmul.f32 %v1052, %v296
    %v1115 = vmul.f32 %v1055, %v301
    %v1116 = vmul.f32 %v1060, %v306
    %v1117 = vmul.f32 %v1063, %v311
    %v1118 = vmul.f32 %v1068, %v316
    %v1119 = vmul.f32 %v1071, %v321
    %v1120 = vmul.f32 %v1076, %v326
    %v1121 = vmul.f32 %v1079, %v331
    %v1122 = vmul.f32 %v1084, %v336
    %v1123 = vmul.f32 %v1087, %v341
    %v1124 = vmul.f32 %v1092, %v346
    %v1125 = vmul.f32 %v1095, %v351
    %v1126 = vmul.f32 %v1100, %v356
    %v1127 = vmul.f32 %v1103, %v361
    %v1128 = vmul.f32 %v1108, %v366
    %v1129 = vmul.f32 %v1111, %v371
    %v1130 = vpack.c.bf16 %v1115, %v1114
    %v1131 = vpack.c.bf16 %v1117, %v1116
    %v1132 = vpack.c.bf16 %v1119, %v1118
    %v1133 = vpack.c.bf16 %v1121, %v1120
    %v1134 = vpack.c.bf16 %v1123, %v1122
    %v1135 = vpack.c.bf16 %v1125, %v1124
    %v1136 = vpack.c.bf16 %v1127, %v1126
    %v1137 = vpack.c.bf16 %v1129, %v1128
    %1138 = vmatprep.subr.bf16.mxu0 0
    %1139 = vmatpush1.bf16.msra.mxu0 %v1137
    %1140 = vmatprep.subr.bf16.mxu0 0
    %1141 = vmatpush1.bf16.msra.mxu0 %v1136
    %1142 = vmatprep.subr.bf16.mxu0 0
    %1143 = vmatpush1.bf16.msra.mxu0 %v1135
    %1144 = vmatprep.subr.bf16.mxu0 0
    %1145 = vmatpush1.bf16.msra.mxu0 %v1134
    %1146 = vmatprep.subr.bf16.mxu0 0
    %1147 = vmatpush1.bf16.msra.mxu0 %v1133
    %1148 = vmatprep.subr.bf16.mxu0 0
    %1149 = vmatpush1.bf16.msra.mxu0 %v1132
    %1150 = vmatprep.subr.bf16.mxu0 0
    %1151 = vmatpush1.bf16.msra.mxu0 %v1131
    %1152 = vmatprep.subr.bf16.mxu0 0
    %1153 = vmatpush1.bf16.msra.mxu0 %v1130
    %1154 = vmatprep.subr.bf16.mxu0 0
    %1155 = vmatpush2.bf16.msra.mxu0 0
    %1156 = vmatprep.subr.bf16.mxu0 0
    %1157 = vmatpush2.bf16.msra.mxu0 0
    %1158 = vmatprep.subr.bf16.mxu0 0
    %1159 = vmatpush2.bf16.msra.mxu0 0
    %1160 = vmatprep.subr.bf16.mxu0 0
    %1161 = vmatpush2.bf16.msra.mxu0 0
    %1162 = vmatprep.subr.bf16.mxu0 0
    %1163 = vmatpush2.bf16.msra.mxu0 0
    %1164 = vmatprep.subr.bf16.mxu0 0
    %1165 = vmatpush2.bf16.msra.mxu0 0
    %1166 = vmatprep.subr.bf16.mxu0 0
    %1167 = vmatpush2.bf16.msra.mxu0 0
    %1168 = vmatprep.subr.bf16.mxu0 0
    %1169 = vmatpush2.bf16.msra.mxu0 0
    %1170 = vmatprep.mubr.bf16.mxu0 0
    %1171 = vmatmul.mubr.bf16.gmra.mxu0 %v429
    %v1172 = vpop.f32.mrf.mxu0
    %v1173 = vadd.f32 0.0, %v1172
    %v1174 = vpop.f32.mrf.mxu0
    %v1175 = vpop.f32.mrf.mxu0
    %v1176 = vadd.f32 0.0, %v1175
    %v1177 = vpop.f32.mrf.mxu0
    %1178 = vmatprep.mubr.bf16.mxu0 0
    %1179 = vmatmul.mubr.bf16.gmra.mxu0 %v430
    %v1180 = vpop.f32.mrf.mxu0
    %v1181 = vadd.f32 0.0, %v1180
    %v1182 = vpop.f32.mrf.mxu0
    %v1183 = vpop.f32.mrf.mxu0
    %v1184 = vadd.f32 0.0, %v1183
    %v1185 = vpop.f32.mrf.mxu0
    %1186 = vmatprep.mubr.bf16.mxu0 0
    %1187 = vmatmul.mubr.bf16.gmra.mxu0 %v431
    %v1188 = vpop.f32.mrf.mxu0
    %v1189 = vadd.f32 0.0, %v1188
    %v1190 = vpop.f32.mrf.mxu0
    %v1191 = vpop.f32.mrf.mxu0
    %v1192 = vadd.f32 0.0, %v1191
    %v1193 = vpop.f32.mrf.mxu0
    %1194 = vmatprep.mubr.bf16.mxu0 0
    %1195 = vmatmul.mubr.bf16.gmra.mxu0 %v432
    %v1196 = vpop.f32.mrf.mxu0
    %v1197 = vadd.f32 0.0, %v1196
    %v1198 = vpop.f32.mrf.mxu0
    %v1199 = vpop.f32.mrf.mxu0
    %v1200 = vadd.f32 0.0, %v1199
    %v1201 = vpop.f32.mrf.mxu0
    %1202 = vmatprep.mubr.bf16.mxu0 0
    %1203 = vmatmul.mubr.bf16.gmra.mxu0 %v433
    %v1204 = vpop.f32.mrf.mxu0
    %v1205 = vadd.f32 0.0, %v1204
    %v1206 = vpop.f32.mrf.mxu0
    %v1207 = vpop.f32.mrf.mxu0
    %v1208 = vadd.f32 0.0, %v1207
    %v1209 = vpop.f32.mrf.mxu0
    %1210 = vmatprep.mubr.bf16.mxu0 0
    %1211 = vmatmul.mubr.bf16.gmra.mxu0 %v434
    %v1212 = vpop.f32.mrf.mxu0
    %v1213 = vadd.f32 0.0, %v1212
    %v1214 = vpop.f32.mrf.mxu0
    %v1215 = vpop.f32.mrf.mxu0
    %v1216 = vadd.f32 0.0, %v1215
    %v1217 = vpop.f32.mrf.mxu0
    %1218 = vmatprep.mubr.bf16.mxu0 0
    %1219 = vmatmul.mubr.bf16.gmra.mxu0 %v435
    %v1220 = vpop.f32.mrf.mxu0
    %v1221 = vadd.f32 0.0, %v1220
    %v1222 = vpop.f32.mrf.mxu0
    %v1223 = vpop.f32.mrf.mxu0
    %v1224 = vadd.f32 0.0, %v1223
    %v1225 = vpop.f32.mrf.mxu0
    %1226 = vmatprep.mubr.bf16.mxu0 0
    %1227 = vmatmul.mubr.bf16.gmra.mxu0 %v436
    %v1228 = vpop.f32.mrf.mxu0
    %v1229 = vadd.f32 0.0, %v1228
    %v1230 = vpop.f32.mrf.mxu0
    %v1231 = vpop.f32.mrf.mxu0
    %v1232 = vadd.f32 0.0, %v1231
    %v1233 = vpop.f32.mrf.mxu0
    %1234 = vdwg.mxu0
    %v1235 = vmul.f32 %v1173, %v296
    %v1236 = vmul.f32 %v1176, %v301
    %v1237 = vmul.f32 %v1181, %v306
    %v1238 = vmul.f32 %v1184, %v311
    %v1239 = vmul.f32 %v1189, %v316
    %v1240 = vmul.f32 %v1192, %v321
    %v1241 = vmul.f32 %v1197, %v326
    %v1242 = vmul.f32 %v1200, %v331
    %v1243 = vmul.f32 %v1205, %v336
    %v1244 = vmul.f32 %v1208, %v341
    %v1245 = vmul.f32 %v1213, %v346
    %v1246 = vmul.f32 %v1216, %v351
    %v1247 = vmul.f32 %v1221, %v356
    %v1248 = vmul.f32 %v1224, %v361
    %v1249 = vmul.f32 %v1229, %v366
    %v1250 = vmul.f32 %v1232, %v371
    %s1251 = scalar_lea.vmem %s4, 2
    %v1252 = vld [vmem:[%s1251] sm:$0x1]
    %v1254 = vlaneseq
    %v1255 = vshrl.u32 %v1254, 7
    %v1256 = vsub.s32 0, %v1255
    %v1257 = vrot.slane %v1252, %v1256
    %v1259 = vadd.f32 %v1235, %v1257
    %v1260 = vadd.f32 %v1236, %v1257
    %v1261 = vadd.f32 %v1237, %v1257
    %v1262 = vadd.f32 %v1238, %v1257
    %v1263 = vadd.f32 %v1239, %v1257
    %v1264 = vadd.f32 %v1240, %v1257
    %v1265 = vadd.f32 %v1241, %v1257
    %v1266 = vadd.f32 %v1242, %v1257
    %v1267 = vadd.f32 %v1243, %v1257
    %v1268 = vadd.f32 %v1244, %v1257
    %v1269 = vadd.f32 %v1245, %v1257
    %v1270 = vadd.f32 %v1246, %v1257
    %v1271 = vadd.f32 %v1247, %v1257
    %v1272 = vadd.f32 %v1248, %v1257
    %v1273 = vadd.f32 %v1249, %v1257
    %v1274 = vadd.f32 %v1250, %v1257
    %1275 = vst [vmem:[#allocation5] sm:$0xff] %v1259
    %1276 = vst [vmem:[#allocation5 + $0x8] sm:$0xff] %v1260
    %1277 = vst [vmem:[#allocation5 + $0x10] sm:$0xff] %v1261
    %1278 = vst [vmem:[#allocation5 + $0x18] sm:$0xff] %v1262
    %1279 = vst [vmem:[#allocation5 + $0x20] sm:$0xff] %v1263
    %1280 = vst [vmem:[#allocation5 + $0x28] sm:$0xff] %v1264
    %1281 = vst [vmem:[#allocation5 + $0x30] sm:$0xff] %v1265
    %1282 = vst [vmem:[#allocation5 + $0x38] sm:$0xff] %v1266
    %1283 = vst [vmem:[#allocation5 + $0x40] sm:$0xff] %v1267
    %1284 = vst [vmem:[#allocation5 + $0x48] sm:$0xff] %v1268
    %1285 = vst [vmem:[#allocation5 + $0x50] sm:$0xff] %v1269
    %1286 = vst [vmem:[#allocation5 + $0x58] sm:$0xff] %v1270
    %1287 = vst [vmem:[#allocation5 + $0x60] sm:$0xff] %v1271
    %1288 = vst [vmem:[#allocation5 + $0x68] sm:$0xff] %v1272
    %1289 = vst [vmem:[#allocation5 + $0x70] sm:$0xff] %v1273
    %1290 = vst [vmem:[#allocation5 + $0x78] sm:$0xff] %v1274
    // Predicated region
    $region26: #{tpu_custom_call.1} parent=1 // pred_check
      _
    $region27: #{tpu_custom_call.1} parent=1 // pred_check_branch
      %1292 = sbr.rel (0) target = $region29
    $region28: #{tpu_custom_call.1} parent=1 // pred_region
      %s1294 = ssub.s32 2048, 2048
      %1295 = vsyncadd [#allocation4], %s1294
      %s1296 = sshll.u32 [#allocation5], 4
      %s1297 = int_to_ptr.vmem [resolvable:$true] %s1296
      %1302 = dma.vmem_to_hbm [thread:$0]  %s1297, 2048, %s5, [#allocation4], 128, 128, 8
    $region29: #{tpu_custom_call.1} parent=1 // pred_fallthru
      _
    // Predicated region
    $region30: #{tpu_custom_call.1} parent=1 // pred_check
      _
    $region31: #{tpu_custom_call.1} parent=1 // pred_check_branch
      %1304 = sbr.rel (0) target = $region33
    $region32: #{tpu_custom_call.1} parent=1 // pred_region
      %1305 = dma.done [#allocation4], 2048
    $region33: #{tpu_custom_call.1} parent=1 // pred_fallthru
      _
    %1306 = vsyncpa [#allocation3], 1
    %1307 = vsyncpa [#allocation4], 1

</llo_original>
